<compile_context>
chip_gen: v7x
topology: tpu7x:2x2x1
jax: 0.10.0
libtpu: 0.0.40
codegen_flags: <defaults>
</compile_context>

<pallas_src>
import math
from collections import namedtuple

import jax
import jax.numpy as jnp
from jax import lax
from jax.experimental import pallas as pl
from jax.experimental.pallas import tpu as pltpu


# ----------------------------------------------------------------------------
# helpers
# ----------------------------------------------------------------------------

def _round_up(v, m):
    return (v + m - 1) // m * m


def _const_index_map(ndim):
    def imap(n):
        return (0,) * ndim
    return imap


def _vmem_limit_bytes():
    """Generation-aware VMEM budget (v5e/v6e: 128 MiB, v7x: 64 MiB physical)."""
    try:
        cap = int(pltpu.get_tpu_info().vmem_capacity_bytes)
    except Exception:
        cap = 128 * 1024 * 1024
    return int(min(0.75 * cap, 100 * 1024 * 1024))


_ROLL_LIKE_JNP = None


def _roll_like_jnp():
    """Probe pltpu.roll's rotation direction once (cached, runs eagerly)."""
    global _ROLL_LIKE_JNP
    if _ROLL_LIKE_JNP is None:
        def k(x_ref, o_ref):
            o_ref[...] = pltpu.roll(x_ref[...], 1, 0)

        with jax.ensure_compile_time_eval():
            x = jnp.arange(8 * 128, dtype=jnp.int32).reshape(8, 128)
            y = pl.pallas_call(
                k, out_shape=jax.ShapeDtypeStruct((8, 128), jnp.int32))(x)
            _ROLL_LIKE_JNP = bool(y[1, 0] == x[0, 0])
    return _ROLL_LIKE_JNP


# ----------------------------------------------------------------------------
# in-kernel building blocks (all geometry is static Python)
# ----------------------------------------------------------------------------

def _accumulate_conv3x3(src_flat, w_ref, acc_ref, Wpad, roll_like_jnp):
    """acc[j] = sum_{dy,dx} src_flat[j + (dy-1)*Wpad + (dx-1)] @ w[dy, dx].

    src_flat: (M, Cin) bf16 value = flattened zero-haloed frame.
    w_ref   : (3, 3, Cin, Cout) bf16 ref.
    acc_ref : (M, Cout) f32 VMEM scratch (overwritten).
    The tap shift is applied to the f32 matmul result with pltpu.roll; roll
    wrap-around only lands in halo rows/cols that the epilogue masks away.
    """
    M = src_flat.shape[0]
    for dy in range(3):
        dy_sum = None
        for dx in range(3):
            part = jnp.dot(src_flat, w_ref[dy, dx],
                           preferred_element_type=jnp.float32)
            off = (dy - 1) * Wpad + (dx - 1)
            if off != 0:
                shift = (-off) % M if roll_like_jnp else off % M
                part = pltpu.roll(part, shift, 0)
            dy_sum = part if dy_sum is None else dy_sum + part
        if dy == 0:
            acc_ref[...] = dy_sum
        else:
            acc_ref[...] += dy_sum


def _relu_bias(acc_ref, b_ref, Hp, Wpad, Cout):
    v = jnp.maximum(acc_ref[...] + b_ref[...], 0.0)      # (M, Cout) f32
    return v.reshape(Hp, Wpad, Cout)


def _store_frame(val3d, dst_ref, W):
    """Write a conv+ReLU result into the next padded frame (halo forced to 0)."""
    Hp = val3d.shape[0]
    col = lax.broadcasted_iota(jnp.int32, val3d.shape, 1)
    keep = (col >= 1) & (col <= W)
    dst_ref[...] = jnp.where(keep, val3d, 0.0).astype(dst_ref.dtype)
    zero_row = jnp.zeros(dst_ref.shape[1:], dst_ref.dtype)
    dst_ref[0] = zero_row
    dst_ref[Hp - 1] = zero_row


def _store_output(val3d, o_ref, H, W):
    o_ref[0] = val3d[1:H + 1, 1:W + 1, :].astype(o_ref.dtype)


def _maxpool2x2_into_frame(v, dst_ref, W, c0):
    """2x2 / stride-2 max pool of `v` into the padded frame `dst_ref`.

    v  : (H, Wsrc, C) value; output column xo pairs source columns
         (c0 + 2*xo, c0 + 2*xo + 1).
    TODO(synk): for large W replace the per-column loop with stride-2 loads
    (ref[pl.ds(start, size, 2)]); pooling is a tiny fraction of the work here.
    """
    H = v.shape[0]
    Ho, Wo = H // 2, W // 2
    dst_ref[...] = jnp.zeros(dst_ref.shape, dst_ref.dtype)
    v4 = v.reshape(Ho, 2, v.shape[1], v.shape[2])
    vh = jnp.maximum(v4[:, 0], v4[:, 1]).astype(jnp.float32)   # (Ho, Wsrc, C)
    for xo in range(Wo):
        c = c0 + 2 * xo
        col = jnp.maximum(vh[:, c, :], vh[:, c + 1, :])        # (Ho, C)
        dst_ref[pl.ds(1, Ho), xo + 1, :] = col.astype(dst_ref.dtype)


# ----------------------------------------------------------------------------
# fused-block builder: one pallas_call per VGG slice group
# ----------------------------------------------------------------------------

def _build_plan(plan, H, W, C_in):
    """Walk a block plan and derive static geometry + scratch requirements."""
    steps, frames, accs = [], [], []
    src, cur_H, cur_W, cur_C = "x", H, W, C_in
    p_idx = 0
    for si, op in enumerate(plan):
        final = si == len(plan) - 1
        if op[0] == "pool":
            Ho, Wo = cur_H // 2, cur_W // 2
            dst = len(frames)
            frames.append((Ho + 2, _round_up(Wo + 2, 8), cur_C))
            steps.append(dict(kind="pool", src=src, dst=dst,
                              H=cur_H, W=cur_W, src_is_frame=(src != "x")))
            src, cur_H, cur_W = dst, Ho, Wo
        else:
            kind, cin, cout = op
            assert cin == cur_C
            Hp, Wpad = cur_H + 2, _round_up(cur_W + 2, 8)
            M = Hp * Wpad
            ashape = (M, cout)
            acc = accs.index(ashape) if ashape in accs else len(accs)
            if acc == len(accs):
                accs.append(ashape)
            if final:
                dst = "out"
            else:
                dst = len(frames)
                frames.append((Hp, Wpad, cout))
            steps.append(dict(kind=kind, src=src, dst=dst, acc=acc, param=p_idx,
                              H=cur_H, W=cur_W, Hp=Hp, Wpad=Wpad, M=M,
                              Cin=cin, Cout=cout))
            p_idx += 1
            src, cur_C = dst, cout
    return steps, frames, accs, (cur_H, cur_W, cur_C)


def _make_block_kernel(steps, n_frames, n_accs, n_params, roll_like_jnp):
    def kernel(*refs):
        x_ref = refs[0]
        w_refs = refs[1:1 + 2 * n_params:2]
        b_refs = refs[2:2 + 2 * n_params:2]
        o_ref = refs[1 + 2 * n_params]
        scratch = refs[2 + 2 * n_params:]
        frame_refs = scratch[:n_frames]
        acc_refs = scratch[n_frames:n_frames + n_accs]

        for st in steps:
            if st["kind"] == "pool":
                if st["src_is_frame"]:
                    v = frame_refs[st["src"]][pl.ds(1, st["H"])]
                    c0 = 1
                else:
                    v = x_ref[0]
                    c0 = 0
                _maxpool2x2_into_frame(v, frame_refs[st["dst"]], st["W"], c0)
                continue

            Hp, Wpad, M = st["Hp"], st["Wpad"], st["M"]
            H, W, Cin, Cout = st["H"], st["W"], st["Cin"], st["Cout"]
            w_ref, b_ref = w_refs[st["param"]], b_refs[st["param"]]
            acc_ref = acc_refs[st["acc"]]
            if st["src"] == "x":
                src_flat = x_ref[0].reshape(M, Cin)
            else:
                src_flat = frame_refs[st["src"]][...].reshape(M, Cin)

            if st["kind"] == "dense":
                # conv1_1, pre-im2col'd in the wrapper: one K = 9*Cin matmul.
                acc_ref[...] = jnp.dot(src_flat, w_ref[...],
                                       preferred_element_type=jnp.float32)
            else:
                _accumulate_conv3x3(src_flat, w_ref, acc_ref, Wpad,
                                    roll_like_jnp)

            val3d = _relu_bias(acc_ref, b_ref, Hp, Wpad, Cout)
            if st["dst"] == "out":
                _store_output(val3d, o_ref, H, W)
            else:
                _store_frame(val3d, frame_refs[st["dst"]], W)

    return kernel


def _fused_vgg_block(x, params, plan, H, W, C_in):
    """Run one fused group of VGG layers as a single Pallas kernel.

    x      : ("dense" first op)  (N, H+2, round_up(W+2,8), 9*3) bf16 im2col frame
             ("pool"  first op)  (N, H, W, C_in) f32 feature map
    params : list of (w, b) per dense/conv step, in order
             (dense w: (K, Cout) bf16; conv w: (3,3,Cin,Cout) bf16; b: (1,Cout) f32)
    """
    N = x.shape[0]
    steps, frames, accs, (Ho, Wo, Co) = _build_plan(plan, H, W, C_in)
    kernel = _make_block_kernel(steps, len(frames), len(accs), len(params),
                                _roll_like_jnp())

    in_specs = [pl.BlockSpec((1,) + x.shape[1:], lambda n: (n, 0, 0, 0))]
    flat_params = []
    for w, b in params:
        flat_params += [w, b]
        in_specs.append(pl.BlockSpec(w.shape, _const_index_map(w.ndim)))
        in_specs.append(pl.BlockSpec(b.shape, _const_index_map(b.ndim)))

    scratch_shapes = ([pltpu.VMEM(s, jnp.bfloat16) for s in frames] +
                      [pltpu.VMEM(s, jnp.float32) for s in accs])

    return pl.pallas_call(
        kernel,
        out_shape=jax.ShapeDtypeStruct((N, Ho, Wo, Co), jnp.float32),
        grid=(N,),
        in_specs=in_specs,
        out_specs=pl.BlockSpec((1, Ho, Wo, Co), lambda n: (n, 0, 0, 0)),
        scratch_shapes=scratch_shapes,
        compiler_params=pltpu.CompilerParams(
            dimension_semantics=("parallel",),
            vmem_limit_bytes=_vmem_limit_bytes()),
    )(x, *flat_params)


# ----------------------------------------------------------------------------
# VGG16 (features[0:23]) parameters and forward
# ----------------------------------------------------------------------------

_VGG_CONVS = [(3, 64), (64, 64),                      # conv1_1, conv1_2
              (64, 128), (128, 128),                  # conv2_1, conv2_2
              (128, 256), (256, 256), (256, 256),     # conv3_1..conv3_3
              (256, 512), (512, 512), (512, 512)]     # conv4_1..conv4_3


def init_vgg16_params(key):
    # TODO(synk): torchvision's pretrained VGG16 weights cannot be loaded here;
    # He-style random init with identical tensor shapes is used instead.
    params = []
    for cin, cout in _VGG_CONVS:
        kw, kb, key = jax.random.split(key, 3)
        std = math.sqrt(2.0 / (9.0 * cin))
        w = jax.random.normal(kw, (3, 3, cin, cout), jnp.float32) * std   # HWIO
        b = jax.random.normal(kb, (cout,), jnp.float32) * 0.01
        params.append((w, b))
    return params


VggOutputs = namedtuple("VggOutputs", ["relu2_2", "relu3_3", "relu4_3"])


def _prep(w, b):
    return w.astype(jnp.bfloat16), b.reshape(1, -1).astype(jnp.float32)


def _im2col_conv1_input(x, Hp, Wpad):
    """Build the (N, Hp, Wpad, 27) bf16 im2col frame for conv1_1 (Cin=3)."""
    N, H, W, _ = x.shape
    xp = jnp.pad(x, ((0, 0), (2, 2), (2, Wpad - W), (0, 0)))
    taps = [xp[:, dy:dy + Hp, dx:dx + Wpad, :]
            for dy in range(3) for dx in range(3)]
    return jnp.concatenate(taps, axis=-1).astype(jnp.bfloat16)


def vgg16_feature_extractor(x_nchw, params):
    """x_nchw: (N, 3, H, W) float32 (PyTorch NCHW). Returns NCHW feature maps."""
    x = jnp.transpose(x_nchw, (0, 2, 3, 1)).astype(jnp.float32)   # -> NHWC
    N, H, W, _ = x.shape
    assert H % 4 == 0 and W % 4 == 0

    prep = [_prep(w, b) for (w, b) in params]
    w11 = params[0][0].reshape(27, 64).astype(jnp.bfloat16)   # conv1_1 as K=27
    b11 = prep[0][1]

    Hp1, Wpad1 = H + 2, _round_up(W + 2, 8)
    x27 = _im2col_conv1_input(x, Hp1, Wpad1)

    # block A: conv1_1, conv1_2, pool1, conv2_1, conv2_2 -> relu2_2
    plan_a = [("dense", 27, 64), ("conv", 64, 64), ("pool",),
              ("conv", 64, 128), ("conv", 128, 128)]
    relu2_2 = _fused_vgg_block(
        x27, [(w11, b11), prep[1], prep[2], prep[3]], plan_a, H, W, 27)

    # block B: pool2, conv3_1..conv3_3 -> relu3_3
    plan_b = [("pool",), ("conv", 128, 256), ("conv", 256, 256),
              ("conv", 256, 256)]
    relu3_3 = _fused_vgg_block(
        relu2_2, [prep[4], prep[5], prep[6]], plan_b, H // 2, W // 2, 128)

    # block C: pool3, conv4_1..conv4_3 -> relu4_3
    plan_c = [("pool",), ("conv", 256, 512), ("conv", 512, 512),
              ("conv", 512, 512)]
    relu4_3 = _fused_vgg_block(
        relu3_3, [prep[7], prep[8], prep[9]], plan_c, H // 4, W // 4, 256)

    to_nchw = lambda t: jnp.transpose(t, (0, 3, 1, 2))
    return VggOutputs(to_nchw(relu2_2), to_nchw(relu3_3), to_nchw(relu4_3))


def _reference_vgg(x_nchw, params):
    """Pure-XLA f32 reference with identical semantics (for a sanity check)."""
    h = jnp.transpose(x_nchw, (0, 2, 3, 1)).astype(jnp.float32)
    feats = []
    for i, (w, b) in enumerate(params):
        if i in (2, 4, 7):                       # pool before conv2_1/3_1/4_1
            h = lax.reduce_window(h, -jnp.inf, lax.max,
                                  (1, 2, 2, 1), (1, 2, 2, 1), "VALID")
        h = lax.conv_general_dilated(
            h, w, (1, 1), "SAME", dimension_numbers=("NHWC", "HWIO", "NHWC"))
        h = jnp.maximum(h + b.reshape(1, 1, 1, -1), 0.0)
        if i in (3, 6, 9):
            feats.append(jnp.transpose(h, (0, 3, 1, 2)))
    return VggOutputs(*feats)


if __name__ == "__main__":
    key = jax.random.PRNGKey(0)
    kx, kp = jax.random.split(key)
    x = jax.random.normal(kx, (2, 3, 32, 32), jnp.float32)   # NCHW like PyTorch
    params = init_vgg16_params(kp)

    _roll_like_jnp()   # probe pltpu.roll direction once, before jit tracing

    out = jax.jit(vgg16_feature_extractor)(x, params)
    out = jax.block_until_ready(out)

    assert out.relu2_2.shape == (2, 128, 16, 16)
    assert out.relu3_3.shape == (2, 256, 8, 8)
    assert out.relu4_3.shape == (2, 512, 4, 4)
    assert all(bool(jnp.isfinite(o).all()) for o in out)

    # loose sanity check vs. XLA reference (kernel matmuls run in bf16)
    ref = jax.jit(_reference_vgg)(x, params)
    for got, want in zip(out, ref):
        num = jnp.sqrt(jnp.mean((got - want) ** 2))
        den = jnp.sqrt(jnp.mean(want ** 2)) + 1e-6
        assert float(num / den) < 0.1, f"deviation vs reference: {float(num / den)}"

    print("KERNEL_OK")
</pallas_src>

<mosaic_0001>
module attributes {stable_mosaic.version = 11 : i64} {
  func.func @k(%arg0: memref<8x128xi32, #tpu.memory_space<vmem>>, %arg1: memref<8x128xi32, #tpu.memory_space<vmem>>) attributes {dimension_semantics = [], scalar_prefetch = 0 : i64, scratch_operands = 0 : i64, tpu.core_type = #tpu.core_type<tc>} {
    %c0 = arith.constant 0 : index
    %c0_0 = arith.constant 0 : index
    %0 = vector.load %arg0[%c0, %c0_0] : memref<8x128xi32, #tpu.memory_space<vmem>>, vector<8x128xi32>
    %c1_i32 = arith.constant 1 : i32
    %1 = tpu.dynamic_rotate %0 by %c1_i32 dim 0 : vector<8x128xi32>, i32 -> vector<8x128xi32>
    %c0_1 = arith.constant 0 : index
    %c0_2 = arith.constant 0 : index
    %2 = vector.load %arg1[%c0_1, %c0_2] : memref<8x128xi32, #tpu.memory_space<vmem>>, vector<8x128xi32>
    tpu.vector_store %arg1[%c0_1, %c0_2], %1 {strides = array<i32>} : memref<8x128xi32, #tpu.memory_space<vmem>>, vector<8x128xi32>,
    return
  }
}

</mosaic_0001>

<llo_original>
// kernel: tpu_custom_call.1
$region0: #{tpu_custom_call.1}
  #allocation0 [shape = 'u32[]', space=smem, size = 0x4, offset = 0x4, fixed_abs, tag = 'smem constant byte address 0x4 - core index']
  #allocation1 [shape = 'u32[144,128]{1,0:T(1,128)}', space=vmem, size = 0x12000, scoped, tag = 'internal scratch']
  %s0 = inlined_call_operand.hbm [shape: s32[8,128], index: 0, kind: input, shape index: {}]
  %s1 = inlined_call_operand.hbm [shape: s32[8,128], index: 1, kind: output, shape index: {}]
  %s2 = sld [smem:[#allocation0]]
  $region18: #{tpu_custom_call.1} parent=0
    _
  %s4 = ssub.s32 1, %s2
  %s5 = scalar_select 0, %s4, %s2
  $region1: #{tpu_custom_call.1} parent=0
    #allocation2 [shape = 'u8[4096]{0}', space=vmem, size = 0x1000, scoped, tag = 'input window, operand 0, single buffered']
    #allocation3 [shape = 's32[1]{0}', space=sflag, size = 0x4, scoped, tag = 'scoped memory for tpu_custom_call.1']
    #allocation4 [shape = 's32[1]{0}', space=sflag, size = 0x4, scoped, tag = 'scoped memory for tpu_custom_call.1']
    #allocation5 [shape = 'u8[4096]{0}', space=vmem, size = 0x1000, scoped, tag = 'output window, operand 0, single buffered']
    %6 = vsyncpa [#allocation3], 0
    %7 = vsyncpa [#allocation4], 0
    // Predicated region
    $region2: #{tpu_custom_call.1} parent=1 // pred_check
      _
    $region3: #{tpu_custom_call.1} parent=1 // pred_check_branch
      %9 = sbr.rel (0) target = $region5
    $region4: #{tpu_custom_call.1} parent=1 // pred_region
      %s11 = ssub.s32 128, 128
      %12 = vsyncadd [#allocation3], %s11
      %s14 = sshll.u32 [#allocation2], 4
      %s15 = int_to_ptr.vmem [resolvable:$true] %s14
      %17 = dma.hbm_to_vmem [thread:$0]  %s0, 128, %s15, [#allocation3]
    $region5: #{tpu_custom_call.1} parent=1 // pred_fallthru
      _
    // Predicated region
    $region6: #{tpu_custom_call.1} parent=1 // pred_check
      _
    $region7: #{tpu_custom_call.1} parent=1 // pred_check_branch
      %19 = sbr.rel (0) target = $region9
    $region8: #{tpu_custom_call.1} parent=1 // pred_region
      %20 = dma.done [#allocation3], 128
    $region9: #{tpu_custom_call.1} parent=1 // pred_fallthru
      _
    %v21 = vld [vmem:[#allocation2] sm:$0xff]
    %v22 = vrot.slane %v21, 7
    %23 = vst [vmem:[#allocation5] sm:$0xff] %v22
    // Predicated region
    $region10: #{tpu_custom_call.1} parent=1 // pred_check
      _
    $region11: #{tpu_custom_call.1} parent=1 // pred_check_branch
      %25 = sbr.rel (0) target = $region13
    $region12: #{tpu_custom_call.1} parent=1 // pred_region
      %s27 = ssub.s32 128, 128
      %28 = vsyncadd [#allocation4], %s27
      %s30 = sshll.u32 [#allocation5], 4
      %s31 = int_to_ptr.vmem [resolvable:$true] %s30
      %33 = dma.vmem_to_hbm [thread:$0]  %s31, 128, %s1, [#allocation4]
    $region13: #{tpu_custom_call.1} parent=1 // pred_fallthru
      _
    // Predicated region
    $region14: #{tpu_custom_call.1} parent=1 // pred_check
      _
    $region15: #{tpu_custom_call.1} parent=1 // pred_check_branch
      %35 = sbr.rel (0) target = $region17
    $region16: #{tpu_custom_call.1} parent=1 // pred_region
      %36 = dma.done [#allocation4], 128
    $region17: #{tpu_custom_call.1} parent=1 // pred_fallthru
      _
    %37 = vsyncpa [#allocation3], 1
    %38 = vsyncpa [#allocation4], 1

</llo_original>
